<compile_context>
chip_gen: v6e
topology: v6e:2x2x1
jax: 0.10.0
libtpu: 0.0.40
codegen_flags: <defaults>
</compile_context>

<pallas_src>
import jax
import jax.numpy as jnp
from jax.experimental import pallas as pl
from jax.experimental.pallas import tpu as pltpu


def _round_up(x, m):
    return (x + m - 1) // m * m


def _smooth_l1_partial(pred, label, mask=None):
    pred = pred.astype(jnp.float32)
    label = label.astype(jnp.float32)
    d = pred - label
    ad = jnp.abs(d)
    losses = jnp.where(ad < 1.0, 0.5 * d * d, ad - 0.5)
    if mask is not None:
        losses = losses * mask.astype(jnp.float32)
    return jnp.sum(losses)


def _store_partial(out_ref, partial):
    # Full-tile (unmasked) store: partial goes to [0, 0], zeros elsewhere.
    shp = out_ref.shape
    row = jax.lax.broadcasted_iota(jnp.int32, shp, 0)
    col = jax.lax.broadcasted_iota(jnp.int32, shp, 1)
    out_ref[...] = jnp.where((row == 0) & (col == 0), partial, 0.0)


def _kernel_masked(pred_ref, label_ref, mask_ref, out_ref):
    partial = _smooth_l1_partial(pred_ref[...], label_ref[...], mask_ref[...])
    _store_partial(out_ref, partial)


def _kernel_nomask(pred_ref, label_ref, out_ref):
    partial = _smooth_l1_partial(pred_ref[...], label_ref[...])
    _store_partial(out_ref, partial)


def smooth_l1_loss(pred, label, mask=None, tile_rows=None,
                   target_block_bytes=2 << 20):
    """pred, label: [N, K, 2]; mask: [N, K] or None. Returns scalar f32."""
    n, k, two = pred.shape
    assert two == 2
    cols = 2 * k

    # Lane-dense layout: [N, K, 2] -> [N, 2K] (free row-major reshape).
    pred2 = pred.reshape(n, cols)
    label2 = label.reshape(n, cols)

    itemsize = jnp.dtype(pred.dtype).itemsize
    if tile_rows is None:
        tile_rows = max(8, (target_block_bytes // max(1, cols * itemsize)) // 8 * 8)
    tile_r = int(min(tile_rows, _round_up(n, 8)))
    tile_r = max(8, (tile_r // 8) * 8)

    n_pad = _round_up(n, tile_r)
    num_tiles = n_pad // tile_r
    pad = n_pad - n
    if pad:
        # Zero rows: pred == label == 0 -> loss 0, so padding adds nothing.
        pred2 = jnp.pad(pred2, ((0, pad), (0, 0)))
        label2 = jnp.pad(label2, ((0, pad), (0, 0)))

    in_arrays = [pred2, label2]
    in_specs = [
        pl.BlockSpec((tile_r, cols), lambda i: (i, 0)),
        pl.BlockSpec((tile_r, cols), lambda i: (i, 0)),
    ]
    bytes_accessed = 2 * n_pad * cols * itemsize

    if mask is not None:
        # Expand mask to the lane-dense layout: each mask[n, k] covers the
        # two consecutive (x, y) columns 2k, 2k+1.
        mask2 = jnp.repeat(mask.astype(pred.dtype), 2, axis=-1)
        if pad:
            mask2 = jnp.pad(mask2, ((0, pad), (0, 0)))
        in_arrays.append(mask2)
        in_specs.append(pl.BlockSpec((tile_r, cols), lambda i: (i, 0)))
        bytes_accessed += n_pad * cols * itemsize
        kernel = _kernel_masked
    else:
        kernel = _kernel_nomask

    out_rows = num_tiles * 8
    partials = pl.pallas_call(
        kernel,
        out_shape=jax.ShapeDtypeStruct((out_rows, 128), jnp.float32),
        grid_spec=pltpu.PrefetchScalarGridSpec(
            num_scalar_prefetch=0,
            grid=(num_tiles,),
            in_specs=in_specs,
            out_specs=pl.BlockSpec((8, 128), lambda i: (i, 0)),
        ),
        compiler_params=pltpu.CompilerParams(
            dimension_semantics=("parallel",),
        ),
        cost_estimate=pl.CostEstimate(
            flops=8 * n_pad * cols,
            transcendentals=0,
            bytes_accessed=bytes_accessed + out_rows * 128 * 4,
        ),
    )(*in_arrays)

    # mean_n(sum_{k,2} losses) == total_sum / N
    return jnp.sum(partials) / jnp.float32(n)


def _reference(pred, label, mask=None):
    d = pred - label
    ad = jnp.abs(d)
    losses = jnp.where(ad < 1.0, 0.5 * d * d, ad - 0.5)
    if mask is not None:
        losses = losses * mask[:, :, None]
    return jnp.mean(jnp.sum(losses, axis=(1, 2)), axis=0)


if __name__ == "__main__":
    key = jax.random.PRNGKey(0)
    k1, k2, k3, k4, k5, k6 = jax.random.split(key, 6)

    # Small shapes matching the module's [N, K, 2] contract.
    N, K = 2, 8
    pred = jax.random.normal(k1, (N, K, 2), dtype=jnp.float32)
    label = jax.random.normal(k2, (N, K, 2), dtype=jnp.float32)
    mask = (jax.random.uniform(k3, (N, K)) > 0.3).astype(jnp.float32)

    out_masked = jax.block_until_ready(smooth_l1_loss(pred, label, mask))
    out_nomask = jax.block_until_ready(smooth_l1_loss(pred, label, None))
    ref_masked = _reference(pred, label, mask)
    ref_nomask = _reference(pred, label, None)
    assert jnp.allclose(out_masked, ref_masked, rtol=1e-4, atol=1e-5)
    assert jnp.allclose(out_nomask, ref_nomask, rtol=1e-4, atol=1e-5)

    # Larger case: exercises multi-tile grid, tail-row zero padding, masking.
    N2, K2 = 37, 64
    pred_l = jax.random.normal(k4, (N2, K2, 2), dtype=jnp.float32)
    label_l = jax.random.normal(k5, (N2, K2, 2), dtype=jnp.float32)
    mask_l = (jax.random.uniform(k6, (N2, K2)) > 0.5).astype(jnp.float32)
    out_l = jax.block_until_ready(smooth_l1_loss(pred_l, label_l, mask_l, tile_rows=16))
    ref_l = _reference(pred_l, label_l, mask_l)
    assert jnp.allclose(out_l, ref_l, rtol=1e-4, atol=1e-4)

    out_l_nm = jax.block_until_ready(smooth_l1_loss(pred_l, label_l, None, tile_rows=16))
    ref_l_nm = _reference(pred_l, label_l, None)
    assert jnp.allclose(out_l_nm, ref_l_nm, rtol=1e-4, atol=1e-4)

    print("KERNEL_OK")
</pallas_src>

<mosaic_0001>
module attributes {stable_mosaic.version = 11 : i64} {
  func.func @_kernel_masked(%arg0: i32, %arg1: memref<8x16xf32, #tpu.memory_space<vmem>>, %arg2: memref<8x16xf32, #tpu.memory_space<vmem>>, %arg3: memref<8x16xf32, #tpu.memory_space<vmem>>, %arg4: memref<8x128xf32, #tpu.memory_space<vmem>>) attributes {dimension_semantics = [#tpu.dimension_semantics<parallel>], iteration_bounds = array<i64: 1>, scalar_prefetch = 0 : i64, scratch_operands = 0 : i64, tpu.core_type = #tpu.core_type<tc>, window_params = [{transform_indices = @transform_0, window_bounds = array<i64: 8, 16>}, {transform_indices = @transform_1, window_bounds = array<i64: 8, 16>}, {transform_indices = @transform_2, window_bounds = array<i64: 8, 16>}, {transform_indices = @transform_3, window_bounds = array<i64: 8, 128>}]} {
    %c0 = arith.constant 0 : index
    %c0_0 = arith.constant 0 : index
    %0 = vector.load %arg1[%c0, %c0_0] : memref<8x16xf32, #tpu.memory_space<vmem>>, vector<8x16xf32>
    %c0_1 = arith.constant 0 : index
    %c0_2 = arith.constant 0 : index
    %1 = vector.load %arg2[%c0_1, %c0_2] : memref<8x16xf32, #tpu.memory_space<vmem>>, vector<8x16xf32>
    %c0_3 = arith.constant 0 : index
    %c0_4 = arith.constant 0 : index
    %2 = vector.load %arg3[%c0_3, %c0_4] : memref<8x16xf32, #tpu.memory_space<vmem>>, vector<8x16xf32>
    %3 = arith.subf %0, %1 : vector<8x16xf32>
    %4 = math.absf %3 : vector<8x16xf32>
    %cst = arith.constant 1.000000e+00 : f32
    %5 = vector.broadcast %cst : f32 to vector<8x16xf32>
    %6 = arith.cmpf olt, %4, %5 : vector<8x16xf32>
    %cst_5 = arith.constant 5.000000e-01 : f32
    %7 = vector.broadcast %cst_5 : f32 to vector<8x16xf32>
    %8 = arith.mulf %7, %3 : vector<8x16xf32>
    %9 = arith.mulf %8, %3 : vector<8x16xf32>
    %cst_6 = arith.constant 5.000000e-01 : f32
    %10 = vector.broadcast %cst_6 : f32 to vector<8x16xf32>
    %11 = arith.subf %4, %10 : vector<8x16xf32>
    %12 = arith.select %6, %9, %11 : vector<8x16xi1>, vector<8x16xf32>
    %13 = arith.mulf %12, %2 : vector<8x16xf32>
    %14 = vector.shape_cast %13 : vector<8x16xf32> to vector<1x8x16xf32>
    %cst_7 = arith.constant dense<0.000000e+00> : vector<1xf32>
    %15 = vector.multi_reduction <add>, %14, %cst_7 [1, 2] : vector<1x8x16xf32> to vector<1xf32>
    %16 = vector.shape_cast %15 : vector<1xf32> to vector<1x1x1xf32>
    %17 = vector.extract %16[0, 0, 0] : f32 from vector<1x1x1xf32>
    %18 = tpu.iota {dimensions = array<i32: 0>} : vector<8x128xi32>
    %19 = tpu.iota {dimensions = array<i32: 1>} : vector<8x128xi32>
    %c0_i32 = arith.constant 0 : i32
    %20 = vector.broadcast %c0_i32 : i32 to vector<8x128xi32>
    %21 = arith.cmpi eq, %18, %20 : vector<8x128xi32>
    %c0_i32_8 = arith.constant 0 : i32
    %22 = vector.broadcast %c0_i32_8 : i32 to vector<8x128xi32>
    %23 = arith.cmpi eq, %19, %22 : vector<8x128xi32>
    %24 = arith.andi %21, %23 : vector<8x128xi1>
    %cst_9 = arith.constant 0.000000e+00 : f32
    %25 = vector.broadcast %17 : f32 to vector<8x128xf32>
    %26 = vector.broadcast %cst_9 : f32 to vector<8x128xf32>
    %27 = arith.select %24, %25, %26 : vector<8x128xi1>, vector<8x128xf32>
    %c0_10 = arith.constant 0 : index
    %c0_11 = arith.constant 0 : index
    %28 = vector.load %arg4[%c0_10, %c0_11] : memref<8x128xf32, #tpu.memory_space<vmem>>, vector<8x128xf32>
    tpu.vector_store %arg4[%c0_10, %c0_11], %27 {strides = array<i32>} : memref<8x128xf32, #tpu.memory_space<vmem>>, vector<8x128xf32>,
    return
  }
  func.func @transform_0(%arg0: i32) -> (i32, i32) {
    %c0_i32 = arith.constant 0 : i32
    %c0_i32_0 = arith.constant 0 : i32
    return %arg0, %c0_i32 : i32, i32
  }
  func.func @transform_1(%arg0: i32) -> (i32, i32) {
    %c0_i32 = arith.constant 0 : i32
    %c0_i32_0 = arith.constant 0 : i32
    return %arg0, %c0_i32 : i32, i32
  }
  func.func @transform_2(%arg0: i32) -> (i32, i32) {
    %c0_i32 = arith.constant 0 : i32
    %c0_i32_0 = arith.constant 0 : i32
    return %arg0, %c0_i32 : i32, i32
  }
  func.func @transform_3(%arg0: i32) -> (i32, i32) {
    %c0_i32 = arith.constant 0 : i32
    %c0_i32_0 = arith.constant 0 : i32
    return %arg0, %c0_i32 : i32, i32
  }
}

</mosaic_0001>

<llo_original>
// kernel: tpu_custom_call.1
$region0: #{tpu_custom_call.1}
  #allocation0 [shape = 'u32[]', space=smem, size = 0x4, offset = 0x4, fixed_abs, tag = 'smem constant byte address 0x4 - core index']
  #allocation1 [shape = 'u32[144,128]{1,0:T(1,128)}', space=vmem, size = 0x12000, scoped, tag = 'internal scratch']
  %s0 = inlined_call_operand.hbm [shape: f32[8,16], index: 0, kind: input, shape index: {}]
  %s1 = inlined_call_operand.hbm [shape: f32[8,16], index: 1, kind: input, shape index: {}]
  %s2 = inlined_call_operand.hbm [shape: f32[8,16], index: 2, kind: input, shape index: {}]
  %s3 = inlined_call_operand.hbm [shape: f32[8,128], index: 3, kind: output, shape index: {}]
  %s4 = sld [smem:[#allocation0]]
  $region34: #{tpu_custom_call.1} parent=0
    _
  %s6 = ssub.s32 1, %s4
  %s7 = scalar_select 0, %s6, %s4
  $region1: #{tpu_custom_call.1} parent=0
    #allocation2 [shape = 'u8[4096]{0}', space=vmem, size = 0x1000, scoped, tag = 'input window, operand 0, single buffered']
    #allocation3 [shape = 's32[1]{0}', space=sflag, size = 0x4, scoped, tag = 'scoped memory for tpu_custom_call.1']
    #allocation4 [shape = 's32[1]{0}', space=sflag, size = 0x4, scoped, tag = 'scoped memory for tpu_custom_call.1']
    #allocation5 [shape = 'u8[4096]{0}', space=vmem, size = 0x1000, scoped, tag = 'input window, operand 1, single buffered']
    #allocation6 [shape = 's32[1]{0}', space=sflag, size = 0x4, scoped, tag = 'scoped memory for tpu_custom_call.1']
    #allocation7 [shape = 'u8[4096]{0}', space=vmem, size = 0x1000, scoped, tag = 'input window, operand 2, single buffered']
    #allocation8 [shape = 'u8[4096]{0}', space=vmem, size = 0x1000, scoped, tag = 'output window, operand 0, single buffered']
    %8 = vsyncpa [#allocation3], 0
    %9 = vsyncpa [#allocation6], 0
    %10 = vsyncpa [#allocation4], 0
    // Predicated region
    $region2: #{tpu_custom_call.1} parent=1 // pred_check
      _
    $region3: #{tpu_custom_call.1} parent=1 // pred_check_branch
      %12 = sbr.rel (0) target = $region5
    $region4: #{tpu_custom_call.1} parent=1 // pred_region
      %s14 = ssub.s32 128, 128
      %15 = vsyncadd [#allocation3], %s14
      %s17 = sshll.u32 [#allocation2], 4
      %s18 = int_to_ptr.vmem [resolvable:$true] %s17
      %20 = dma.hbm_to_vmem [thread:$0]  %s0, 128, %s18, [#allocation3]
    $region5: #{tpu_custom_call.1} parent=1 // pred_fallthru
      _
    // Predicated region
    $region6: #{tpu_custom_call.1} parent=1 // pred_check
      _
    $region7: #{tpu_custom_call.1} parent=1 // pred_check_branch
      %22 = sbr.rel (0) target = $region9
    $region8: #{tpu_custom_call.1} parent=1 // pred_region
      %s24 = ssub.s32 128, 128
      %25 = vsyncadd [#allocation6], %s24
      %s27 = sshll.u32 [#allocation5], 4
      %s28 = int_to_ptr.vmem [resolvable:$true] %s27
      %30 = dma.hbm_to_vmem [thread:$0]  %s1, 128, %s28, [#allocation6]
    $region9: #{tpu_custom_call.1} parent=1 // pred_fallthru
      _
    // Predicated region
    $region10: #{tpu_custom_call.1} parent=1 // pred_check
      _
    $region11: #{tpu_custom_call.1} parent=1 // pred_check_branch
      %32 = sbr.rel (0) target = $region13
    $region12: #{tpu_custom_call.1} parent=1 // pred_region
      %s34 = ssub.s32 128, 128
      %35 = vsyncadd [#allocation6], %s34
      %s37 = sshll.u32 [#allocation7], 4
      %s38 = int_to_ptr.vmem [resolvable:$true] %s37
      %40 = dma.hbm_to_vmem [thread:$0]  %s2, 128, %s38, [#allocation6]
    $region13: #{tpu_custom_call.1} parent=1 // pred_fallthru
      _
    // Predicated region
    $region14: #{tpu_custom_call.1} parent=1 // pred_check
      _
    $region15: #{tpu_custom_call.1} parent=1 // pred_check_branch
      %42 = sbr.rel (0) target = $region17
    $region16: #{tpu_custom_call.1} parent=1 // pred_region
      %43 = dma.done [#allocation3], 128
    $region17: #{tpu_custom_call.1} parent=1 // pred_fallthru
      _
    // Predicated region
    $region18: #{tpu_custom_call.1} parent=1 // pred_check
      _
    $region19: #{tpu_custom_call.1} parent=1 // pred_check_branch
      %45 = sbr.rel (0) target = $region21
    $region20: #{tpu_custom_call.1} parent=1 // pred_region
      %46 = dma.done [#allocation6], 128
    $region21: #{tpu_custom_call.1} parent=1 // pred_fallthru
      _
    // Predicated region
    $region22: #{tpu_custom_call.1} parent=1 // pred_check
      _
    $region23: #{tpu_custom_call.1} parent=1 // pred_check_branch
      %48 = sbr.rel (0) target = $region25
    $region24: #{tpu_custom_call.1} parent=1 // pred_region
      %49 = dma.done [#allocation6], 128
    $region25: #{tpu_custom_call.1} parent=1 // pred_fallthru
      _
    %v50 = vld [vmem:[#allocation2] sm:$0xff]
    %v51 = vld [vmem:[#allocation5] sm:$0xff]
    %v52 = vld [vmem:[#allocation7] sm:$0xff]
    %v53 = vsub.f32 %v50, %v51
    %v54 = vand.u32 2147483647, %v53
    %vm55 = vcmp.lt.f32.partialorder %v54, 1.0
    %v56 = vmul.f32 %v53, 0.5
    %v57 = vmul.f32 %v56, %v53
    %v58 = vsub.f32 %v54, 0.5
    %v59 = vsel %vm55, %v57, %v58
    %v60 = vmul.f32 %v59, %v52
    %vm61 = vcmask 130048
    %v62 = vsel %vm61, %v60, 0.0
    %63 = vadd.xlane.f32.xlu0 %v62
    %v64 = vpop.xlane.xlu0 %63
    %v65 = vrot.slane %v64, 4
    %v66 = vadd.f32 %v64, %v65
    %v67 = vrot.slane %v66, 2
    %v68 = vadd.f32 %v66, %v67
    %v69 = vrot.slane %v68, 1
    %v70 = vadd.f32 %v68, %v69
    %s71 = vtos %v70
    %v72 = vlaneseq
    %v73 = vshrl.u32 %v72, 7
    %v74 = vlaneseq
    %v75 = vand.u32 %v74, 127
    %vm76 = vcmp.eq.s32.totalorder %v73, 0
    %vm77 = vcmp.eq.s32.totalorder %v75, 0
    %vm78 = vmand %vm76, %vm77
    %v79 = vstv %s71
    %v80 = vsel %vm78, %v79, 0.0
    %81 = vst [vmem:[#allocation8] sm:$0xff] %v80
    // Predicated region
    $region26: #{tpu_custom_call.1} parent=1 // pred_check
      _
    $region27: #{tpu_custom_call.1} parent=1 // pred_check_branch
      %83 = sbr.rel (0) target = $region29
    $region28: #{tpu_custom_call.1} parent=1 // pred_region
      %s85 = ssub.s32 128, 128
      %86 = vsyncadd [#allocation4], %s85
      %s88 = sshll.u32 [#allocation8], 4
      %s89 = int_to_ptr.vmem [resolvable:$true] %s88
      %91 = dma.vmem_to_hbm [thread:$0]  %s89, 128, %s3, [#allocation4]
    $region29: #{tpu_custom_call.1} parent=1 // pred_fallthru
      _
    // Predicated region
    $region30: #{tpu_custom_call.1} parent=1 // pred_check
      _
    $region31: #{tpu_custom_call.1} parent=1 // pred_check_branch
      %93 = sbr.rel (0) target = $region33
    $region32: #{tpu_custom_call.1} parent=1 // pred_region
      %94 = dma.done [#allocation4], 128
    $region33: #{tpu_custom_call.1} parent=1 // pred_fallthru
      _
    %95 = vsyncpa [#allocation3], 1
    %96 = vsyncpa [#allocation6], 1
    %97 = vsyncpa [#allocation4], 1

</llo_original>
